<compile_context>
chip_gen: v6e
topology: v6e:2x2x1
jax: 0.10.0
libtpu: 0.0.40
codegen_flags: <defaults>
</compile_context>

<pallas_src>
import jax
import jax.numpy as jnp
from jax import lax
from jax.experimental import pallas as pl
from jax.experimental.pallas import tpu as pltpu

B = 25          # batch_size hardcoded in get_emb / forward
S = 200         # sequence length hardcoded in get_emb
EMB = 300       # embedding_dim
OUT = 1         # output_size
VOCAB = 128     # synthetic small vocab (vocab_size)


def _fused_last_token_head_kernel(ids_ref, emb_ref, w_ref, b_ref, o_ref):
    # ids_ref: (B, 1)       int32 VMEM — last-token word ids per batch row
    # emb_ref: (VOCAB, EMB) f32   VMEM — full embedding table (~150 KB)
    # w_ref:   (1, EMB)     f32   VMEM — fc weight as a lane-dense row (OUT == 1)
    # b_ref:   (1, 1)       f32   SMEM — fc bias scalar
    # o_ref:   (B, 1)       f32   VMEM — sigmoid scores, natural sublane layout
    ids = ids_ref[...]                                                     # (B, 1)
    onehot = (lax.broadcasted_iota(jnp.int32, (B, VOCAB), 1) == ids
              ).astype(jnp.float32)                                        # (B, VOCAB)
    # MXU one-hot gather: one vmatmul fuses the embedding lookup and leaves the
    # 25 gathered rows lane-aligned in vregs (no HBM x_last round trip).
    # Note: an out-of-range id yields an all-zero row here (torch.nn.Embedding
    # would raise); ids are guaranteed in [0, VOCAB) by the wrapper.
    x = jnp.dot(onehot, emb_ref[...], preferred_element_type=jnp.float32)  # (B, EMB)
    # OUT == 1 head: VPU broadcast-multiply + XLU lane reduce (keepdims keeps
    # the per-row scalars on their sublanes -> no transpose), + EUP sigmoid.
    y = jnp.sum(x * w_ref[...], axis=1, keepdims=True) + b_ref[0, 0]       # (B, 1)
    o_ref[...] = jax.nn.sigmoid(y)


def fused_last_token_head(last_ids, emb_table, w_row, b):
    """last_ids: (B, 1) int32, emb_table: (VOCAB, EMB) f32,
    w_row: (1, EMB) f32, b: (1, 1) f32  ->  (B, 1) f32 sigmoid scores."""
    cost = pl.CostEstimate(
        flops=2 * B * VOCAB * EMB + 2 * B * EMB,   # one-hot gather matmul + head reduce
        transcendentals=B,                          # B sigmoids
        bytes_accessed=VOCAB * EMB * 4 + EMB * 4 + B * 4 + 4 + B * 4,
    )
    return pl.pallas_call(
        _fused_last_token_head_kernel,
        out_shape=jax.ShapeDtypeStruct((B, OUT), jnp.float32),
        # Single block, no grid: the whole problem is ~180 KB, so avoid any
        # per-grid-step overhead and place everything in VMEM/SMEM once.
        in_specs=[
            pl.BlockSpec(memory_space=pltpu.MemorySpace.VMEM),   # last_ids
            pl.BlockSpec(memory_space=pltpu.MemorySpace.VMEM),   # emb_table
            pl.BlockSpec(memory_space=pltpu.MemorySpace.VMEM),   # w_row
            pl.BlockSpec(memory_space=pltpu.MemorySpace.SMEM),   # bias scalar
        ],
        out_specs=pl.BlockSpec(memory_space=pltpu.MemorySpace.VMEM),
        cost_estimate=cost,
    )(last_ids, emb_table, w_row, b)


def cnn_sentiment_forward(params, input_words):
    """Reproduces the module's forward: sigmoid(fc(emb(input_words)))[:, -1].

    input_words: (25, 200) int32 token ids.
    returns:     (25,) float32.
    """
    emb_table, fc_w, fc_b = params
    # Only the last token of each row contributes to `[:, -1]` (OUT == 1).
    last_ids = input_words[:, -1].reshape(B, 1).astype(jnp.int32)          # (B, 1)
    sig = fused_last_token_head(
        last_ids,
        emb_table.astype(jnp.float32),
        fc_w.reshape(1, EMB).astype(jnp.float32),
        fc_b.reshape(1, 1).astype(jnp.float32),
    )                                                                      # (B, 1)
    return sig[:, 0]                                                       # (B,)


def init_params(key):
    k_emb, k_w, k_b = jax.random.split(key, 3)
    # nn.Embedding(vocab_size, embedding_dim): N(0, 1) init
    emb_table = jax.random.normal(k_emb, (VOCAB, EMB), dtype=jnp.float32)
    # row 0 is the zero/pad vector (mirrors load_embedding_file's zero_tensor for id 0)
    emb_table = emb_table.at[0].set(0.0)
    # nn.Linear(embedding_dim, output_size): U(-1/sqrt(EMB), 1/sqrt(EMB))
    bound = 1.0 / jnp.sqrt(jnp.float32(EMB))
    fc_w = jax.random.uniform(k_w, (EMB, OUT), dtype=jnp.float32,
                              minval=-bound, maxval=bound)
    fc_b = jax.random.uniform(k_b, (1, OUT), dtype=jnp.float32,
                              minval=-bound, maxval=bound)
    return emb_table, fc_w, fc_b


if __name__ == "__main__":
    key = jax.random.PRNGKey(0)
    k_params, k_words = jax.random.split(key)
    params = init_params(k_params)

    # input_words: (25, 200) word ids, as implied by get_emb
    input_words = jax.random.randint(k_words, (B, S), 0, VOCAB, dtype=jnp.int32)

    out = cnn_sentiment_forward(params, input_words)
    out = jax.block_until_ready(out)

    # Reference check in pure JAX against the FULL original pipeline
    # (embed all tokens -> fc -> sigmoid -> view(25, -1)[:, -1]) to prove the
    # last-token shortcut + in-kernel one-hot gather preserve the semantics.
    emb_table, fc_w, fc_b = params
    ref_full = jax.nn.sigmoid(
        jnp.take(emb_table, input_words, axis=0) @ fc_w + fc_b[0])   # (B, S, 1)
    ref = ref_full.reshape(B, -1)[:, -1]                             # (B,)

    assert out.shape == (B,)
    assert jnp.allclose(out, ref, atol=1e-5, rtol=1e-5)

    print("KERNEL_OK")
</pallas_src>

<mosaic_0001>
module attributes {stable_mosaic.version = 11 : i64} {
  func.func @_fused_last_token_head_kernel(%arg0: memref<25x1xi32, #tpu.memory_space<vmem>>, %arg1: memref<128x300xf32, #tpu.memory_space<vmem>>, %arg2: memref<1x300xf32, #tpu.memory_space<vmem>>, %arg3: memref<1x1xf32, #tpu.memory_space<smem>>, %arg4: memref<25x1xf32, #tpu.memory_space<vmem>>) attributes {dimension_semantics = [], scalar_prefetch = 0 : i64, scratch_operands = 0 : i64, tpu.core_type = #tpu.core_type<tc>} {
    %c0 = arith.constant 0 : index
    %c0_0 = arith.constant 0 : index
    %0 = vector.load %arg0[%c0, %c0_0] : memref<25x1xi32, #tpu.memory_space<vmem>>, vector<25x1xi32>
    %1 = tpu.iota {dimensions = array<i32: 1>} : vector<25x128xi32>
    %2 = vector.broadcast %0 : vector<25x1xi32> to vector<25x128xi32>
    %3 = arith.cmpi eq, %1, %2 : vector<25x128xi32>
    %4 = arith.extui %3 : vector<25x128xi1> to vector<25x128xi32>
    %5 = arith.sitofp %4 : vector<25x128xi32> to vector<25x128xf32>
    %c0_1 = arith.constant 0 : index
    %c0_2 = arith.constant 0 : index
    %6 = vector.load %arg1[%c0_1, %c0_2] : memref<128x300xf32, #tpu.memory_space<vmem>>, vector<128x300xf32>
    %cst = arith.constant dense<0.000000e+00> : vector<25x300xf32>
    %7 = tpu.matmul %5, %6, %cst {dimension_numbers = #tpu.dot_dimension_numbers<[1], [0], [0], [1], [0, 0, 1, 1], [], []>} : vector<25x128xf32>, vector<128x300xf32>, vector<25x300xf32> -> vector<25x300xf32>
    %c0_3 = arith.constant 0 : index
    %c0_4 = arith.constant 0 : index
    %8 = vector.load %arg2[%c0_3, %c0_4] : memref<1x300xf32, #tpu.memory_space<vmem>>, vector<1x300xf32>
    %9 = vector.broadcast %8 : vector<1x300xf32> to vector<25x300xf32>
    %10 = arith.mulf %7, %9 : vector<25x300xf32>
    %cst_5 = arith.constant dense<0.000000e+00> : vector<25xf32>
    %11 = vector.multi_reduction <add>, %10, %cst_5 [1] : vector<25x300xf32> to vector<25xf32>
    %12 = vector.shape_cast %11 : vector<25xf32> to vector<25x1xf32>
    %c0_6 = arith.constant 0 : index
    %c0_7 = arith.constant 0 : index
    %13 = memref.load %arg3[%c0_6, %c0_7] : memref<1x1xf32, #tpu.memory_space<smem>>
    %14 = vector.broadcast %13 : f32 to vector<25x1xf32>
    %15 = arith.addf %12, %14 : vector<25x1xf32>
    %16 = arith.negf %15 : vector<25x1xf32>
    %17 = math.exp %16 : vector<25x1xf32>
    %cst_8 = arith.constant 1.000000e+00 : f32
    %18 = vector.broadcast %cst_8 : f32 to vector<25x1xf32>
    %19 = arith.addf %18, %17 : vector<25x1xf32>
    %20 = arith.divf %18, %19 : vector<25x1xf32>
    %c0_9 = arith.constant 0 : index
    %c0_10 = arith.constant 0 : index
    %21 = vector.load %arg4[%c0_9, %c0_10] : memref<25x1xf32, #tpu.memory_space<vmem>>, vector<25x1xf32>
    tpu.vector_store %arg4[%c0_9, %c0_10], %20 {strides = array<i32>} : memref<25x1xf32, #tpu.memory_space<vmem>>, vector<25x1xf32>,
    return
  }
}

</mosaic_0001>

<llo_original>
// kernel: tpu_custom_call.1
$region0: #{tpu_custom_call.1}
  #allocation0 [shape = 'u32[]', space=smem, size = 0x4, offset = 0x4, fixed_abs, tag = 'smem constant byte address 0x4 - core index']
  #allocation1 [shape = 'u32[144,128]{1,0:T(1,128)}', space=vmem, size = 0x12000, scoped, tag = 'internal scratch']
  #allocation2 [shape = 'f32[1,1]{1,0:T(1,128)S(6)}', space=smem, size = 0x200, scoped, tag = 'scoped memory for tpu_custom_call.1']
  %s0 = inlined_call_operand.vmem [shape: s32[25,1], index: 0, kind: input, shape index: {}]
  %s1 = inlined_call_operand.vmem [shape: f32[128,300], index: 1, kind: input, shape index: {}]
  %s2 = inlined_call_operand.vmem [shape: f32[1,300], index: 2, kind: input, shape index: {}]
  %s3 = inlined_call_operand.<no memory space> [shape: f32[1,1], index: 3, kind: input, shape index: {}]
  %s4 = inlined_call_operand.vmem [shape: f32[25,1], index: 4, kind: output, shape index: {}]
  %s5 = sld [smem:[#allocation0]]
  $region26: #{tpu_custom_call.1} parent=0
    _
  %s7 = ssub.s32 1, %s5
  %s8 = scalar_select 0, %s7, %s5
  %9 = sst [smem:[#allocation2]] %s3
  // Predicated region
  $region2: #{tpu_custom_call.1} parent=0 // pred_check
    _
  $region3: #{tpu_custom_call.1} parent=0 // pred_check_branch
    %11 = sbr.rel (0) target = $region5
  $region4: #{tpu_custom_call.1} parent=0 // pred_region
    _
  $region5: #{tpu_custom_call.1} parent=0 // pred_fallthru
    _
  // Predicated region
  $region6: #{tpu_custom_call.1} parent=0 // pred_check
    _
  $region7: #{tpu_custom_call.1} parent=0 // pred_check_branch
    %13 = sbr.rel (0) target = $region9
  $region8: #{tpu_custom_call.1} parent=0 // pred_region
    _
  $region9: #{tpu_custom_call.1} parent=0 // pred_fallthru
    _
  // Predicated region
  $region10: #{tpu_custom_call.1} parent=0 // pred_check
    _
  $region11: #{tpu_custom_call.1} parent=0 // pred_check_branch
    %15 = sbr.rel (0) target = $region13
  $region12: #{tpu_custom_call.1} parent=0 // pred_region
    _
  $region13: #{tpu_custom_call.1} parent=0 // pred_fallthru
    _
  // Predicated region
  $region14: #{tpu_custom_call.1} parent=0 // pred_check
    _
  $region15: #{tpu_custom_call.1} parent=0 // pred_check_branch
    %17 = sbr.rel (0) target = $region17
  $region16: #{tpu_custom_call.1} parent=0 // pred_region
    _
  $region17: #{tpu_custom_call.1} parent=0 // pred_fallthru
    _
  %v18 = vld [vmem:[%s0] sm:$0xff]
  %v19 = vld [vmem:[%s0 + $0x8] sm:$0xff]
  %v20 = vld [vmem:[%s0 + $0x10] sm:$0xff]
  %v21 = vld [vmem:[%s0 + $0x18] sm:$0x1]
  %v22 = vlaneseq
  %v23 = vand.u32 %v22, 127
  %24 = vset.pattern.permute.xlu0 0
  %25 = vperm.xlu0 %24, %v18
  %v26 = vpop.permute.xlu0 %25
  %27 = vset.pattern.permute.xlu0 0
  %28 = vperm.xlu0 %27, %v19
  %v29 = vpop.permute.xlu0 %28
  %30 = vset.pattern.permute.xlu0 0
  %31 = vperm.xlu0 %30, %v20
  %v32 = vpop.permute.xlu0 %31
  %33 = vset.pattern.permute.xlu0 0
  %34 = vperm.xlu0 %33, %v21
  %v35 = vpop.permute.xlu0 %34
  %vm36 = vcmp.eq.s32.totalorder %v23, %v26
  %vm37 = vcmp.eq.s32.totalorder %v23, %v29
  %vm38 = vcmp.eq.s32.totalorder %v23, %v32
  %vm39 = vcmp.eq.s32.totalorder %v23, %v35
  %v40 = vsel %vm36, 1, 0
  %v41 = vsel %vm37, 1, 0
  %v42 = vsel %vm38, 1, 0
  %v43 = vsel %vm39, 1, 0
  %v44 = vcvt.s32.f32 %v40
  %v45 = vcvt.s32.f32 %v41
  %v46 = vcvt.s32.f32 %v42
  %v47 = vcvt.s32.f32 %v43
  %v48 = vld [vmem:[%s1] sm:$0xff]
  %v49 = vld [vmem:[%s1 + $0x8] sm:$0xff]
  %v50 = vld [vmem:[%s1 + $0x10] sm:$0xff]
  %v51 = vld [vmem:[%s1 + $0x18] sm:$0xff]
  %v52 = vld [vmem:[%s1 + $0x20] sm:$0xff]
  %v53 = vld [vmem:[%s1 + $0x28] sm:$0xff]
  %v54 = vld [vmem:[%s1 + $0x30] sm:$0xff]
  %v55 = vld [vmem:[%s1 + $0x38] sm:$0xff]
  %v56 = vld [vmem:[%s1 + $0x40] sm:$0xff]
  %v57 = vld [vmem:[%s1 + $0x48] sm:$0xff]
  %v58 = vld [vmem:[%s1 + $0x50] sm:$0xff]
  %v59 = vld [vmem:[%s1 + $0x58] sm:$0xff]
  %v60 = vld [vmem:[%s1 + $0x60] sm:$0xff]
  %v61 = vld [vmem:[%s1 + $0x68] sm:$0xff]
  %v62 = vld [vmem:[%s1 + $0x70] sm:$0xff]
  %v63 = vld [vmem:[%s1 + $0x78] sm:$0xff]
  %v64 = vld [vmem:[%s1 + $0x80] sm:$0xff]
  %v65 = vld [vmem:[%s1 + $0x88] sm:$0xff]
  %v66 = vld [vmem:[%s1 + $0x90] sm:$0xff]
  %v67 = vld [vmem:[%s1 + $0x98] sm:$0xff]
  %v68 = vld [vmem:[%s1 + $0xa0] sm:$0xff]
  %v69 = vld [vmem:[%s1 + $0xa8] sm:$0xff]
  %v70 = vld [vmem:[%s1 + $0xb0] sm:$0xff]
  %v71 = vld [vmem:[%s1 + $0xb8] sm:$0xff]
  %v72 = vld [vmem:[%s1 + $0xc0] sm:$0xff]
  %v73 = vld [vmem:[%s1 + $0xc8] sm:$0xff]
  %v74 = vld [vmem:[%s1 + $0xd0] sm:$0xff]
  %v75 = vld [vmem:[%s1 + $0xd8] sm:$0xff]
  %v76 = vld [vmem:[%s1 + $0xe0] sm:$0xff]
  %v77 = vld [vmem:[%s1 + $0xe8] sm:$0xff]
  %v78 = vld [vmem:[%s1 + $0xf0] sm:$0xff]
  %v79 = vld [vmem:[%s1 + $0xf8] sm:$0xff]
  %v80 = vld [vmem:[%s1 + $0x100] sm:$0xff]
  %v81 = vld [vmem:[%s1 + $0x108] sm:$0xff]
  %v82 = vld [vmem:[%s1 + $0x110] sm:$0xff]
  %v83 = vld [vmem:[%s1 + $0x118] sm:$0xff]
  %v84 = vld [vmem:[%s1 + $0x120] sm:$0xff]
  %v85 = vld [vmem:[%s1 + $0x128] sm:$0xff]
  %v86 = vld [vmem:[%s1 + $0x130] sm:$0xff]
  %v87 = vld [vmem:[%s1 + $0x138] sm:$0xff]
  %v88 = vld [vmem:[%s1 + $0x140] sm:$0xff]
  %v89 = vld [vmem:[%s1 + $0x148] sm:$0xff]
  %v90 = vld [vmem:[%s1 + $0x150] sm:$0xff]
  %v91 = vld [vmem:[%s1 + $0x158] sm:$0xff]
  %v92 = vld [vmem:[%s1 + $0x160] sm:$0xff]
  %v93 = vld [vmem:[%s1 + $0x168] sm:$0xff]
  %v94 = vld [vmem:[%s1 + $0x170] sm:$0xff]
  %v95 = vld [vmem:[%s1 + $0x178] sm:$0xff]
  %96 = vmatprep.subr.mxu0 %v94
  %97 = vmatpush1.msra.mxu0 %v93
  %98 = vmatprep.subr.mxu0 %v91
  %99 = vmatpush1.msra.mxu0 %v90
  %100 = vmatprep.subr.mxu0 %v88
  %101 = vmatpush1.msra.mxu0 %v87
  %102 = vmatprep.subr.mxu0 %v85
  %103 = vmatpush1.msra.mxu0 %v84
  %104 = vmatprep.subr.mxu0 %v82
  %105 = vmatpush1.msra.mxu0 %v81
  %106 = vmatprep.subr.mxu0 %v79
  %107 = vmatpush1.msra.mxu0 %v78
  %108 = vmatprep.subr.mxu0 %v76
  %109 = vmatpush1.msra.mxu0 %v75
  %110 = vmatprep.subr.mxu0 %v73
  %111 = vmatpush1.msra.mxu0 %v72
  %112 = vmatprep.subr.mxu0 %v70
  %113 = vmatpush1.msra.mxu0 %v69
  %114 = vmatprep.subr.mxu0 %v67
  %115 = vmatpush1.msra.mxu0 %v66
  %116 = vmatprep.subr.mxu0 %v64
  %117 = vmatpush1.msra.mxu0 %v63
  %118 = vmatprep.subr.mxu0 %v61
  %119 = vmatpush1.msra.mxu0 %v60
  %120 = vmatprep.subr.mxu0 %v58
  %121 = vmatpush1.msra.mxu0 %v57
  %122 = vmatprep.subr.mxu0 %v55
  %123 = vmatpush1.msra.mxu0 %v54
  %124 = vmatprep.subr.mxu0 %v52
  %125 = vmatpush1.msra.mxu0 %v51
  %126 = vmatprep.subr.mxu0 %v49
  %127 = vmatpush1.msra.mxu0 %v48
  %128 = vmatprep.subr.mxu0 0.0
  %129 = vmatpush2.msra.mxu0 0.0
  %130 = vmatprep.subr.mxu0 0.0
  %131 = vmatpush2.msra.mxu0 0.0
  %132 = vmatprep.subr.mxu0 0.0
  %133 = vmatpush2.msra.mxu0 0.0
  %134 = vmatprep.subr.mxu0 0.0
  %135 = vmatpush2.msra.mxu0 0.0
  %136 = vmatprep.subr.mxu0 0.0
  %137 = vmatpush2.msra.mxu0 0.0
  %138 = vmatprep.subr.mxu0 0.0
  %139 = vmatpush2.msra.mxu0 0.0
  %140 = vmatprep.subr.mxu0 0.0
  %141 = vmatpush2.msra.mxu0 0.0
  %142 = vmatprep.subr.mxu0 0.0
  %143 = vmatpush2.msra.mxu0 0.0
  %144 = vmatprep.subr.mxu0 0.0
  %145 = vmatpush2.msra.mxu0 0.0
  %146 = vmatprep.subr.mxu0 0.0
  %147 = vmatpush2.msra.mxu0 0.0
  %148 = vmatprep.subr.mxu0 0.0
  %149 = vmatpush2.msra.mxu0 0.0
  %150 = vmatprep.subr.mxu0 0.0
  %151 = vmatpush2.msra.mxu0 0.0
  %152 = vmatprep.subr.mxu0 0.0
  %153 = vmatpush2.msra.mxu0 0.0
  %154 = vmatprep.subr.mxu0 0.0
  %155 = vmatpush2.msra.mxu0 0.0
  %156 = vmatprep.subr.mxu0 0.0
  %157 = vmatpush2.msra.mxu0 0.0
  %158 = vmatprep.subr.mxu0 0.0
  %159 = vmatpush2.msra.mxu0 0.0
  %160 = vmatprep.mubr.f32.mxu0 0.0
  %161 = vmatmul.mubr.f32.gmra.mxu0 %v44
  %v162 = vpop.f32.mrf.mxu0
  %v163 = vadd.f32 0.0, %v162
  %v164 = vpop.f32.mrf.mxu0
  %v165 = vadd.f32 0.0, %v164
  %166 = vmatprep.mubr.f32.mxu0 0.0
  %167 = vmatmul.mubr.f32.gmra.mxu0 %v45
  %v168 = vpop.f32.mrf.mxu0
  %v169 = vadd.f32 0.0, %v168
  %v170 = vpop.f32.mrf.mxu0
  %v171 = vadd.f32 0.0, %v170
  %172 = vmatprep.mubr.f32.mxu0 0.0
  %173 = vmatmul.mubr.f32.gmra.mxu0 %v46
  %v174 = vpop.f32.mrf.mxu0
  %v175 = vadd.f32 0.0, %v174
  %v176 = vpop.f32.mrf.mxu0
  %v177 = vadd.f32 0.0, %v176
  %178 = vmatprep.mubr.f32.mxu0 0.0
  %179 = vmatmul.mubr.f32.gmra.mxu0 %v47
  %v180 = vpop.f32.mrf.mxu0
  %v181 = vadd.f32 0.0, %v180
  %v182 = vpop.f32.mrf.mxu0
  %v183 = vadd.f32 0.0, %v182
  %184 = vdwg.mxu0
  %185 = vmatprep.subr.mxu0 0.0
  %186 = vmatpush1.msra.mxu0 %v95
  %187 = vmatprep.subr.mxu0 0.0
  %188 = vmatpush1.msra.mxu0 %v92
  %189 = vmatprep.subr.mxu0 0.0
  %190 = vmatpush1.msra.mxu0 %v89
  %191 = vmatprep.subr.mxu0 0.0
  %192 = vmatpush1.msra.mxu0 %v86
  %193 = vmatprep.subr.mxu0 0.0
  %194 = vmatpush1.msra.mxu0 %v83
  %195 = vmatprep.subr.mxu0 0.0
  %196 = vmatpush1.msra.mxu0 %v80
  %197 = vmatprep.subr.mxu0 0.0
  %198 = vmatpush1.msra.mxu0 %v77
  %199 = vmatprep.subr.mxu0 0.0
  %200 = vmatpush1.msra.mxu0 %v74
  %201 = vmatprep.subr.mxu0 0.0
  %202 = vmatpush1.msra.mxu0 %v71
  %203 = vmatprep.subr.mxu0 0.0
  %204 = vmatpush1.msra.mxu0 %v68
  %205 = vmatprep.subr.mxu0 0.0
  %206 = vmatpush1.msra.mxu0 %v65
  %207 = vmatprep.subr.mxu0 0.0
  %208 = vmatpush1.msra.mxu0 %v62
  %209 = vmatprep.subr.mxu0 0.0
  %210 = vmatpush1.msra.mxu0 %v59
  %211 = vmatprep.subr.mxu0 0.0
  %212 = vmatpush1.msra.mxu0 %v56
  %213 = vmatprep.subr.mxu0 0.0
  %214 = vmatpush1.msra.mxu0 %v53
  %215 = vmatprep.subr.mxu0 0.0
  %216 = vmatpush1.msra.mxu0 %v50
  %217 = vmatprep.subr.mxu0 0.0
  %218 = vmatpush2.msra.mxu0 0.0
  %219 = vmatprep.subr.mxu0 0.0
  %220 = vmatpush2.msra.mxu0 0.0
  %221 = vmatprep.subr.mxu0 0.0
  %222 = vmatpush2.msra.mxu0 0.0
  %223 = vmatprep.subr.mxu0 0.0
  %224 = vmatpush2.msra.mxu0 0.0
  %225 = vmatprep.subr.mxu0 0.0
  %226 = vmatpush2.msra.mxu0 0.0
  %227 = vmatprep.subr.mxu0 0.0
  %228 = vmatpush2.msra.mxu0 0.0
  %229 = vmatprep.subr.mxu0 0.0
  %230 = vmatpush2.msra.mxu0 0.0
  %231 = vmatprep.subr.mxu0 0.0
  %232 = vmatpush2.msra.mxu0 0.0
  %233 = vmatprep.subr.mxu0 0.0
  %234 = vmatpush2.msra.mxu0 0.0
  %235 = vmatprep.subr.mxu0 0.0
  %236 = vmatpush2.msra.mxu0 0.0
  %237 = vmatprep.subr.mxu0 0.0
  %238 = vmatpush2.msra.mxu0 0.0
  %239 = vmatprep.subr.mxu0 0.0
  %240 = vmatpush2.msra.mxu0 0.0
  %241 = vmatprep.subr.mxu0 0.0
  %242 = vmatpush2.msra.mxu0 0.0
  %243 = vmatprep.subr.mxu0 0.0
  %244 = vmatpush2.msra.mxu0 0.0
  %245 = vmatprep.subr.mxu0 0.0
  %246 = vmatpush2.msra.mxu0 0.0
  %247 = vmatprep.subr.mxu0 0.0
  %248 = vmatpush2.msra.mxu0 0.0
  %249 = vmatprep.mubr.f32.mxu0 0.0
  %250 = vmatmul.mubr.f32.gmra.mxu0 %v44
  %v251 = vpop.f32.mrf.mxu0
  %v252 = vadd.f32 0.0, %v251
  %v253 = vpop.f32.mrf.mxu0
  %254 = vmatprep.mubr.f32.mxu0 0.0
  %255 = vmatmul.mubr.f32.gmra.mxu0 %v45
  %v256 = vpop.f32.mrf.mxu0
  %v257 = vadd.f32 0.0, %v256
  %v258 = vpop.f32.mrf.mxu0
  %259 = vmatprep.mubr.f32.mxu0 0.0
  %260 = vmatmul.mubr.f32.gmra.mxu0 %v46
  %v261 = vpop.f32.mrf.mxu0
  %v262 = vadd.f32 0.0, %v261
  %v263 = vpop.f32.mrf.mxu0
  %264 = vmatprep.mubr.f32.mxu0 0.0
  %265 = vmatmul.mubr.f32.gmra.mxu0 %v47
  %v266 = vpop.f32.mrf.mxu0
  %v267 = vadd.f32 0.0, %v266
  %v268 = vpop.f32.mrf.mxu0
  %269 = vdwg.mxu0
  %v270 = vld [vmem:[%s2] sm:$0x7]
  %v272 = vlaneseq
  %v273 = vshrl.u32 %v272, 7
  %v274 = vsub.s32 0, %v273
  %v275 = vrot.slane %v270, %v274
  %v276 = vlaneseq
  %v277 = vshrl.u32 %v276, 7
  %v278 = vsub.s32 1, %v277
  %v279 = vrot.slane %v270, %v278
  %v280 = vlaneseq
  %v281 = vshrl.u32 %v280, 7
  %v282 = vsub.s32 2, %v281
  %v283 = vrot.slane %v270, %v282
  %v287 = vmul.f32 %v163, %v275
  %v288 = vmul.f32 %v165, %v279
  %v289 = vmul.f32 %v252, %v283
  %v290 = vmul.f32 %v169, %v275
  %v291 = vmul.f32 %v171, %v279
  %v292 = vmul.f32 %v257, %v283
  %v293 = vmul.f32 %v175, %v275
  %v294 = vmul.f32 %v177, %v279
  %v295 = vmul.f32 %v262, %v283
  %v296 = vmul.f32 %v181, %v275
  %v297 = vmul.f32 %v183, %v279
  %v298 = vmul.f32 %v267, %v283
  %v299 = vadd.f32 %v287, %v288
  %vm300 = vcmask 359424
  %v301 = vsel %vm300, %v289, 0.0
  %v302 = vadd.f32 %v299, %v301
  %303 = vadd.xlane.f32.xlu0 %v302
  %v304 = vpop.xlane.xlu0 %303
  %v305 = vadd.f32 %v290, %v291
  %v306 = vsel %vm300, %v292, 0.0
  %v307 = vadd.f32 %v305, %v306
  %308 = vadd.xlane.f32.xlu0 %v307
  %v309 = vpop.xlane.xlu0 %308
  %v310 = vadd.f32 %v293, %v294
  %v311 = vsel %vm300, %v295, 0.0
  %v312 = vadd.f32 %v310, %v311
  %313 = vadd.xlane.f32.xlu0 %v312
  %v314 = vpop.xlane.xlu0 %313
  %vm315 = vcmask 1040384
  %v316 = vsel %vm315, %v296, 0.0
  %v317 = vsel %vm315, %v297, 0.0
  %v318 = vadd.f32 %v316, %v317
  %vm319 = vcmask 352256
  %v320 = vsel %vm319, %v298, 0.0
  %v321 = vadd.f32 %v318, %v320
  %322 = vadd.xlane.f32.xlu0 %v321
  %v323 = vpop.xlane.xlu0 %322
  %s324 = sld [smem:[#allocation2]]
  %v325 = vstv %s324
  %v326 = vadd.f32 %v304, %v325
  %v327 = vadd.f32 %v309, %v325
  %v328 = vadd.f32 %v314, %v325
  %v329 = vadd.f32 %v323, %v325
  %v330 = vxor.u32 %v326, 2147483648
  %v331 = vxor.u32 %v327, 2147483648
  %v332 = vxor.u32 %v328, 2147483648
  %v333 = vxor.u32 %v329, 2147483648
  %v334 = vmul.f32 %v330, 1.442695
  %v335 = vpow.pop %v334
  %v336 = vmul.f32 %v331, 1.442695
  %v337 = vpow.pop %v336
  %v338 = vmul.f32 %v332, 1.442695
  %v339 = vpow.pop %v338
  %v340 = vmul.f32 %v333, 1.442695
  %v341 = vpow.pop %v340
  %v342 = vadd.f32 %v335, 1.0
  %v343 = vadd.f32 %v337, 1.0
  %v344 = vadd.f32 %v339, 1.0
  %v345 = vadd.f32 %v341, 1.0
  %v346 = vrcp.pop %v342
  %v347 = vmul.f32 1.0, %v346
  %v348 = vrcp.pop %v343
  %v349 = vmul.f32 1.0, %v348
  %v350 = vrcp.pop %v344
  %v351 = vmul.f32 1.0, %v350
  %v352 = vrcp.pop %v345
  %v353 = vmul.f32 1.0, %v352
  %vm354 = vcmask 7168
  %355 = vst.msk [vmem:[%s4] sm:$0xff] %vm354, %v347
  %356 = vst.msk [vmem:[%s4 + $0x8] sm:$0xff] %vm354, %v349
  %357 = vst.msk [vmem:[%s4 + $0x10] sm:$0xff] %vm354, %v351
  %vm358 = vcmask 0
  %359 = vst.msk [vmem:[%s4 + $0x18] sm:$0x1] %vm358, %v353
  // Predicated region
  $region18: #{tpu_custom_call.1} parent=0 // pred_check
    _
  $region19: #{tpu_custom_call.1} parent=0 // pred_check_branch
    %361 = sbr.rel (0) target = $region21
  $region20: #{tpu_custom_call.1} parent=0 // pred_region
    _
  $region21: #{tpu_custom_call.1} parent=0 // pred_fallthru
    _
  // Predicated region
  $region22: #{tpu_custom_call.1} parent=0 // pred_check
    _
  $region23: #{tpu_custom_call.1} parent=0 // pred_check_branch
    %363 = sbr.rel (0) target = $region25
  $region24: #{tpu_custom_call.1} parent=0 // pred_region
    _
  $region25: #{tpu_custom_call.1} parent=0 // pred_fallthru
    _

</llo_original>
